<compile_context>
chip_gen: v7x
topology: tpu7x:2x2x1
jax: 0.10.0
libtpu: 0.0.40
codegen_flags: <defaults>
</compile_context>

<pallas_src>
import math
from functools import partial

import jax
import jax.numpy as jnp
from jax import lax
from jax.experimental import pallas as pl
from jax.experimental.pallas import tpu as pltpu


def _roll_last(x, s):
    """Roll 2-D array x along its last (lane) axis by s toward higher indices."""
    L = x.shape[-1]
    s = s % L
    if s == 0:
        return x
    return jnp.concatenate([x[:, L - s:], x[:, :L - s]], axis=-1)


def _cyclic_shift_flat_kernel(x_ref, o_ref, *, dh, dw, h, w):
    # x_ref / o_ref: (TR, L) with L = H*W; both rolled axes live in the lane dim.
    x = x_ref[...]
    L = h * w
    s1 = (dh * w + dw) % L

    if dw == 0:
        # Rolling only the H axis is a single flat roll by dh*W.
        o_ref[...] = _roll_last(x, s1)
        return

    s2 = (s1 - w) % L
    r1 = _roll_last(x, s1)          # correct wherever (j % W) >= dw
    r2 = _roll_last(x, s2)          # correct wherever (j % W) <  dw (W-axis wrap)
    col = lax.broadcasted_iota(jnp.int32, x.shape, 1)
    mask = (col % w) >= dw
    o_ref[...] = jnp.where(mask, r1, r2)


def _pick_row_tile(rows, bytes_per_row, budget_bytes=8 * 1024 * 1024):
    """Row tile: whole array if it fits, else a multiple of 8 within budget."""
    if rows * bytes_per_row <= budget_bytes:
        return rows
    tr = max(budget_bytes // bytes_per_row, 1)
    if tr >= 8:
        tr -= tr % 8          # keep second-minor block dim sublane-aligned
    else:
        tr = min(8, rows)
    return max(1, min(tr, rows))


def cyclic_shift(x, d, dims=(2, 3)):
    """Pallas TPU equivalent of torch.roll(x, shifts=(d, d), dims=dims)."""
    ndim = x.ndim
    dims = tuple(ax % ndim for ax in dims)
    assert len(dims) == 2 and dims[0] != dims[1], "CyclicShift rolls two distinct dims"

    # Move the two rolled axes to the last two positions (no-op for the default
    # NCHW / dims=(2, 3) case, so no transpose cost in the test path).
    perm = [ax for ax in range(ndim) if ax not in dims] + list(dims)
    need_perm = perm != list(range(ndim))
    xt = jnp.transpose(x, perm) if need_perm else x

    lead = xt.shape[:-2]
    H, W = xt.shape[-2], xt.shape[-1]
    rows = int(math.prod(lead)) if lead else 1
    L = H * W

    # Lane-dense 2-D view: leading dims -> sublanes, rolled (H, W) -> lanes.
    x2 = xt.reshape(rows, L)

    dh = int(d) % H
    dw = int(d) % W

    tr = _pick_row_tile(rows, L * x2.dtype.itemsize)
    grid = (pl.cdiv(rows, tr),)

    out2 = pl.pallas_call(
        partial(_cyclic_shift_flat_kernel, dh=dh, dw=dw, h=H, w=W),
        out_shape=jax.ShapeDtypeStruct((rows, L), x2.dtype),
        grid_spec=pltpu.PrefetchScalarGridSpec(
            num_scalar_prefetch=0,
            grid=grid,
            # Last block dim == full array dim, so the 128-lane divisibility
            # rule does not apply; rows axis tiled (multiple of 8 or full).
            in_specs=[pl.BlockSpec((tr, L), lambda i: (i, 0))],
            out_specs=pl.BlockSpec((tr, L), lambda i: (i, 0)),
        ),
        compiler_params=pltpu.CompilerParams(
            dimension_semantics=("parallel",)),
    )(x2)

    out = out2.reshape(lead + (H, W))
    if need_perm:
        inv = [0] * ndim
        for i, p in enumerate(perm):
            inv[p] = i
        out = jnp.transpose(out, inv)
    return out


if __name__ == "__main__":
    key = jax.random.PRNGKey(0)

    # Small NCHW shape consistent with the module, default dims=(2, 3).
    B, C, H, W = 2, 4, 16, 16
    x = jax.random.normal(key, (B, C, H, W), dtype=jnp.float32)

    ok = True

    # Main case: d = 3 (exercises the two-roll + select path).
    d = 3
    out = jax.block_until_ready(cyclic_shift(x, d))
    ref = jnp.roll(x, shift=(d, d), axis=(2, 3))
    ok &= out.shape == x.shape and bool(jnp.array_equal(out, ref))

    # dw == dh == 0 path (d multiple of both H and W -> pure copy).
    d = 16
    out = jax.block_until_ready(cyclic_shift(x, d))
    ref = jnp.roll(x, shift=(d, d), axis=(2, 3))
    ok &= bool(jnp.array_equal(out, ref))

    # Different aspect ratio (H=8, W=32) and bf16 dtype, negative shift.
    x2 = jax.random.normal(jax.random.PRNGKey(1), (2, 4, 8, 32),
                           dtype=jnp.bfloat16)
    d = -5
    out2 = jax.block_until_ready(cyclic_shift(x2, d))
    ref2 = jnp.roll(x2, shift=(d, d), axis=(2, 3))
    ok &= bool(jnp.array_equal(out2, ref2))

    assert ok
    print("KERNEL_OK")
</pallas_src>

<mosaic_0001>
module attributes {stable_mosaic.version = 11 : i64} {
  func.func @_cyclic_shift_flat_kernel(%arg0: i32, %arg1: memref<8x256xf32, #tpu.memory_space<vmem>>, %arg2: memref<8x256xf32, #tpu.memory_space<vmem>>) attributes {dimension_semantics = [#tpu.dimension_semantics<parallel>], iteration_bounds = array<i64: 1>, scalar_prefetch = 0 : i64, scratch_operands = 0 : i64, tpu.core_type = #tpu.core_type<tc>, window_params = [{transform_indices = @transform_0, window_bounds = array<i64: 8, 256>}, {transform_indices = @transform_1, window_bounds = array<i64: 8, 256>}]} {
    %c0 = arith.constant 0 : index
    %c0_0 = arith.constant 0 : index
    %0 = vector.load %arg1[%c0, %c0_0] : memref<8x256xf32, #tpu.memory_space<vmem>>, vector<8x256xf32>
    %1 = vector.extract_strided_slice %0 {offsets = [0, 205], sizes = [8, 51], strides = [1, 1]} : vector<8x256xf32> to vector<8x51xf32>
    %2 = vector.extract_strided_slice %0 {offsets = [0, 0], sizes = [8, 205], strides = [1, 1]} : vector<8x256xf32> to vector<8x205xf32>
    %3 = tpu.concatenate %1, %2 in 1 : vector<8x51xf32>, vector<8x205xf32> -> vector<8x256xf32>
    %4 = vector.extract_strided_slice %0 {offsets = [0, 221], sizes = [8, 35], strides = [1, 1]} : vector<8x256xf32> to vector<8x35xf32>
    %5 = vector.extract_strided_slice %0 {offsets = [0, 0], sizes = [8, 221], strides = [1, 1]} : vector<8x256xf32> to vector<8x221xf32>
    %6 = tpu.concatenate %4, %5 in 1 : vector<8x35xf32>, vector<8x221xf32> -> vector<8x256xf32>
    %7 = tpu.iota {dimensions = array<i32: 1>} : vector<8x256xi32>
    %c16_i32 = arith.constant 16 : i32
    %c0_i32 = arith.constant 0 : i32
    %8 = arith.cmpi eq, %c16_i32, %c0_i32 : i32
    %c1_i32 = arith.constant 1 : i32
    %9 = arith.select %8, %c1_i32, %c16_i32 : i32
    %10 = vector.broadcast %9 : i32 to vector<8x256xi32>
    %11 = arith.remsi %7, %10 : vector<8x256xi32>
    %c0_i32_1 = arith.constant 0 : i32
    %12 = vector.broadcast %c0_i32_1 : i32 to vector<8x256xi32>
    %13 = arith.cmpi ne, %11, %12 : vector<8x256xi32>
    %c0_i32_2 = arith.constant 0 : i32
    %14 = vector.broadcast %c0_i32_2 : i32 to vector<8x256xi32>
    %15 = arith.cmpi slt, %11, %14 : vector<8x256xi32>
    %c0_i32_3 = arith.constant 0 : i32
    %16 = arith.cmpi slt, %9, %c0_i32_3 : i32
    %17 = vector.broadcast %16 : i1 to vector<8x256xi1>
    %18 = vector.broadcast %17 : vector<8x256xi1> to vector<8x256xi1>
    %19 = arith.xori %15, %18 : vector<8x256xi1>
    %20 = arith.andi %19, %13 : vector<8x256xi1>
    %21 = vector.broadcast %9 : i32 to vector<8x256xi32>
    %22 = arith.addi %11, %21 : vector<8x256xi32>
    %23 = arith.select %20, %22, %11 : vector<8x256xi1>, vector<8x256xi32>
    %c3_i32 = arith.constant 3 : i32
    %24 = vector.broadcast %c3_i32 : i32 to vector<8x256xi32>
    %25 = arith.cmpi sge, %23, %24 : vector<8x256xi32>
    %26 = arith.select %25, %3, %6 : vector<8x256xi1>, vector<8x256xf32>
    %c0_4 = arith.constant 0 : index
    %c0_5 = arith.constant 0 : index
    %27 = vector.load %arg2[%c0_4, %c0_5] : memref<8x256xf32, #tpu.memory_space<vmem>>, vector<8x256xf32>
    tpu.vector_store %arg2[%c0_4, %c0_5], %26 {strides = array<i32>} : memref<8x256xf32, #tpu.memory_space<vmem>>, vector<8x256xf32>,
    return
  }
  func.func @transform_0(%arg0: i32) -> (i32, i32) {
    %c0_i32 = arith.constant 0 : i32
    %c0_i32_0 = arith.constant 0 : i32
    return %arg0, %c0_i32 : i32, i32
  }
  func.func @transform_1(%arg0: i32) -> (i32, i32) {
    %c0_i32 = arith.constant 0 : i32
    %c0_i32_0 = arith.constant 0 : i32
    return %arg0, %c0_i32 : i32, i32
  }
}

</mosaic_0001>

<llo_original>
// kernel: tpu_custom_call.1
$region0: #{tpu_custom_call.1}
  #allocation0 [shape = 'u32[]', space=smem, size = 0x4, offset = 0x4, fixed_abs, tag = 'smem constant byte address 0x4 - core index']
  #allocation1 [shape = 'u32[144,128]{1,0:T(1,128)}', space=vmem, size = 0x12000, scoped, tag = 'internal scratch']
  %s0 = inlined_call_operand.hbm [shape: f32[8,256], index: 0, kind: input, shape index: {}]
  %s1 = inlined_call_operand.hbm [shape: f32[8,256], index: 1, kind: output, shape index: {}]
  %s2 = sld [smem:[#allocation0]]
  $region18: #{tpu_custom_call.1} parent=0
    _
  %s4 = ssub.s32 1, %s2
  %s5 = scalar_select 0, %s4, %s2
  $region1: #{tpu_custom_call.1} parent=0
    #allocation2 [shape = 'u8[8192]{0}', space=vmem, size = 0x2000, scoped, tag = 'input window, operand 0, single buffered']
    #allocation3 [shape = 's32[1]{0}', space=sflag, size = 0x4, scoped, tag = 'scoped memory for tpu_custom_call.1']
    #allocation4 [shape = 's32[1]{0}', space=sflag, size = 0x4, scoped, tag = 'scoped memory for tpu_custom_call.1']
    #allocation5 [shape = 'u8[8192]{0}', space=vmem, size = 0x2000, scoped, tag = 'output window, operand 0, single buffered']
    %6 = vsyncpa [#allocation3], 0
    %7 = vsyncpa [#allocation4], 0
    // Predicated region
    $region2: #{tpu_custom_call.1} parent=1 // pred_check
      _
    $region3: #{tpu_custom_call.1} parent=1 // pred_check_branch
      %9 = sbr.rel (0) target = $region5
    $region4: #{tpu_custom_call.1} parent=1 // pred_region
      %s11 = ssub.s32 256, 256
      %12 = vsyncadd [#allocation3], %s11
      %s14 = sshll.u32 [#allocation2], 4
      %s15 = int_to_ptr.vmem [resolvable:$true] %s14
      %17 = dma.hbm_to_vmem [thread:$0]  %s0, 256, %s15, [#allocation3]
    $region5: #{tpu_custom_call.1} parent=1 // pred_fallthru
      _
    // Predicated region
    $region6: #{tpu_custom_call.1} parent=1 // pred_check
      _
    $region7: #{tpu_custom_call.1} parent=1 // pred_check_branch
      %19 = sbr.rel (0) target = $region9
    $region8: #{tpu_custom_call.1} parent=1 // pred_region
      %20 = dma.done [#allocation3], 256
    $region9: #{tpu_custom_call.1} parent=1 // pred_fallthru
      _
    %v21 = vld [vmem:[#allocation2] sm:$0xff]
    %v22 = vld [vmem:[#allocation2 + $0x8] sm:$0xff]
    %24 = vrot.lane.b32.xlu0 %v22, 51
    %v25 = vpop.permute.xlu0 %24
    %28 = vrot.lane.b32.xlu0 %v21, 51
    %v29 = vpop.permute.xlu0 %28
    %vm30 = vcmask 416768
    %v31 = vsel %vm30, %v29, %v25
    %v34 = vsel %vm30, %v25, %v29
    %35 = vrot.lane.b32.xlu0 %v22, 35
    %v36 = vpop.permute.xlu0 %35
    %38 = vrot.lane.b32.xlu0 %v21, 35
    %v39 = vpop.permute.xlu0 %38
    %vm40 = vcmask 285696
    %v41 = vsel %vm40, %v39, %v36
    %v44 = vsel %vm40, %v36, %v39
    %v45 = vlaneseq
    %v46 = vand.u32 %v45, 127
    %v47 = vadd.s32 %v46, 128
    %vm48 = vcmp.lt.s32.totalorder %v46, 0
    %v49 = vsub.s32 0, %v46
    %v50 = vsel %vm48, %v49, %v46
    %v51 = vshrl.u32 %v50, 4
    %v52 = vand.u32 %v50, 15
    %v53 = vsub.s32 0, %v52
    %v54 = vsel %vm48, %v53, %v52
    %vm55 = vcmp.lt.s32.totalorder %v47, 0
    %v56 = vsub.s32 0, %v47
    %v57 = vsel %vm55, %v56, %v47
    %v58 = vshrl.u32 %v57, 4
    %v59 = vand.u32 %v57, 15
    %v60 = vsub.s32 0, %v59
    %v61 = vsel %vm55, %v60, %v59
    %vm62 = vcmp.ne.s32.totalorder %v54, 0
    %vm63 = vcmp.ne.s32.totalorder %v61, 0
    %vm64 = vcmp.lt.s32.totalorder %v54, 0
    %vm65 = vcmp.lt.s32.totalorder %v61, 0
    %vm66 = vmand %vm64, %vm62
    %vm67 = vmand %vm65, %vm63
    %v68 = vadd.s32 %v54, 16
    %v69 = vadd.s32 %v61, 16
    %v70 = vsel %vm66, %v68, %v54
    %v71 = vsel %vm67, %v69, %v61
    %vm72 = vcmp.ge.s32.totalorder %v70, 3
    %vm73 = vcmp.ge.s32.totalorder %v71, 3
    %v74 = vsel %vm72, %v34, %v44
    %v75 = vsel %vm73, %v31, %v41
    %76 = vst [vmem:[#allocation5] sm:$0xff] %v74
    %77 = vst [vmem:[#allocation5 + $0x8] sm:$0xff] %v75
    // Predicated region
    $region10: #{tpu_custom_call.1} parent=1 // pred_check
      _
    $region11: #{tpu_custom_call.1} parent=1 // pred_check_branch
      %79 = sbr.rel (0) target = $region13
    $region12: #{tpu_custom_call.1} parent=1 // pred_region
      %s81 = ssub.s32 256, 256
      %82 = vsyncadd [#allocation4], %s81
      %s84 = sshll.u32 [#allocation5], 4
      %s85 = int_to_ptr.vmem [resolvable:$true] %s84
      %87 = dma.vmem_to_hbm [thread:$0]  %s85, 256, %s1, [#allocation4]
    $region13: #{tpu_custom_call.1} parent=1 // pred_fallthru
      _
    // Predicated region
    $region14: #{tpu_custom_call.1} parent=1 // pred_check
      _
    $region15: #{tpu_custom_call.1} parent=1 // pred_check_branch
      %89 = sbr.rel (0) target = $region17
    $region16: #{tpu_custom_call.1} parent=1 // pred_region
      %90 = dma.done [#allocation4], 256
    $region17: #{tpu_custom_call.1} parent=1 // pred_fallthru
      _
    %91 = vsyncpa [#allocation3], 1
    %92 = vsyncpa [#allocation4], 1

</llo_original>
